<compile_context>
chip_gen: v5e
topology: v5e:2x2
jax: 0.10.0
libtpu: 0.0.40
codegen_flags: <defaults>
</compile_context>

<pallas_src>
import functools

import jax
import jax.numpy as jnp
from jax.experimental import pallas as pl
from jax.experimental.pallas import tpu as pltpu


def shortcut_kernel(x_ref, w_ref, bias_ref, y_ref, o_ref):
    # x_ref:    (1, C_in_p,  TL)
    # w_ref:    (C_out_p, C_in_p)   conv weight with BN scale folded in (resident)
    # bias_ref: (C_out_p, 1)        folded BN bias = beta - mean * scale (resident)
    # y_ref:    (1, C_out_p, TL)
    # o_ref:    (1, C_out_p, TL)
    x = x_ref[0]                                                     # (C_in_p, TL)
    z = jnp.dot(w_ref[...], x, preferred_element_type=jnp.float32)   # conv1d k=1 on MXU
    z = z + bias_ref[...]                                            # folded BN (eval)
    z = z + y_ref[0].astype(jnp.float32)                             # skip connection
    o_ref[0] = jnp.maximum(z, 0.0).astype(o_ref.dtype)               # ReLU


def _round_up(x, m):
    return ((x + m - 1) // m) * m


def _cdiv(a, b):
    return -(-a // b)


def _choose_tile_l(L, c_in_p, c_out_p, budget_bytes=12 * 1024 * 1024, max_tl=2048):
    """Lane tile (multiple of 128) that fits the double-buffered VMEM budget and
    minimizes L padding waste by splitting the 128-padded length into even tiles."""
    L128 = _round_up(max(L, 1), 128)
    bytes_per_lane = 2 * (c_in_p + 2 * c_out_p) * 4          # 2 bufs each (x, y, out), f32
    tl_cap = budget_bytes // max(bytes_per_lane, 1)
    tl_cap = max(128, min(max_tl, (tl_cap // 128) * 128))
    if L128 <= tl_cap:
        return L128
    n_tiles = _cdiv(L128, tl_cap)
    tl = _round_up(_cdiv(L128, n_tiles), 128)                # even split, 128-aligned
    return min(tl, tl_cap)


def _maybe_pad(a, pads):
    if all(p == (0, 0) for p in pads):
        return a
    return jnp.pad(a, pads)


@functools.partial(jax.jit, static_argnames=("eps",))
def shortcut_forward(x, y, conv_w, bn_gamma, bn_beta, bn_mean, bn_var, eps=1e-5):
    """x: (N, C_in, L) f32, y: (N, C_out, L) f32, conv_w: (C_out, C_in) f32."""
    N, C_in, L = x.shape
    C_out = conv_w.shape[0]
    assert y.shape == (N, C_out, L)

    # --- fold BN (inference) into the conv weight + a per-channel bias (plain-JAX glue) ---
    scale = bn_gamma / jnp.sqrt(bn_var + eps)                     # (C_out,)
    w_scaled = (conv_w * scale[:, None]).astype(jnp.float32)      # (C_out, C_in)
    bias = (bn_beta - bn_mean * scale).astype(jnp.float32)        # (C_out,)

    # --- pad channels to sublane multiples and L to a lane-dense tile multiple ---
    C_in_p = _round_up(max(C_in, 8), 8)
    C_out_p = _round_up(max(C_out, 8), 8)
    TL = _choose_tile_l(L, C_in_p, C_out_p)
    L_pad = _round_up(L, TL)
    n_l_tiles = L_pad // TL

    x_p = _maybe_pad(x, ((0, 0), (0, C_in_p - C_in), (0, L_pad - L)))
    y_p = _maybe_pad(y, ((0, 0), (0, C_out_p - C_out), (0, L_pad - L)))
    w_p = _maybe_pad(w_scaled, ((0, C_out_p - C_out), (0, C_in_p - C_in)))
    b_p = _maybe_pad(bias, ((0, C_out_p - C_out),)).reshape(C_out_p, 1)

    # --- VMEM budget: double-buffered streaming blocks + resident weight/bias, with margin ---
    stream_bytes = 2 * (C_in_p + 2 * C_out_p) * TL * 4
    resident_bytes = 2 * (C_out_p * C_in_p + C_out_p) * 4
    vmem_limit = min(max(4 * (stream_bytes + resident_bytes), 16 * 1024 * 1024),
                     48 * 1024 * 1024)

    cost = pl.CostEstimate(
        flops=2 * N * C_out_p * C_in_p * L_pad,
        transcendentals=0,
        bytes_accessed=4 * N * L_pad * (C_in_p + 2 * C_out_p),
    )

    out_p = pl.pallas_call(
        shortcut_kernel,
        out_shape=jax.ShapeDtypeStruct((N, C_out_p, L_pad), x.dtype),
        grid_spec=pltpu.PrefetchScalarGridSpec(
            num_scalar_prefetch=0,
            grid=(N, n_l_tiles),
            in_specs=[
                pl.BlockSpec((1, C_in_p, TL), lambda n, l: (n, 0, l)),   # x tile
                pl.BlockSpec((C_out_p, C_in_p), lambda n, l: (0, 0)),    # folded weight (resident)
                pl.BlockSpec((C_out_p, 1), lambda n, l: (0, 0)),         # folded bias (resident)
                pl.BlockSpec((1, C_out_p, TL), lambda n, l: (n, 0, l)),  # y tile
            ],
            out_specs=pl.BlockSpec((1, C_out_p, TL), lambda n, l: (n, 0, l)),
        ),
        compiler_params=pltpu.CompilerParams(
            dimension_semantics=("parallel", "parallel"),
            vmem_limit_bytes=vmem_limit,
        ),
        cost_estimate=cost,
    )(x_p, w_p, b_p, y_p)

    if C_out_p == C_out and L_pad == L:
        return out_p
    return out_p[:, :C_out, :L]


def reference_forward(x, y, conv_w, bn_gamma, bn_beta, bn_mean, bn_var, eps=1e-5):
    z = jnp.einsum("oc,ncl->nol", conv_w, x)
    scale = bn_gamma / jnp.sqrt(bn_var + eps)
    z = z * scale[None, :, None] + (bn_beta - bn_mean * scale)[None, :, None]
    return jnp.maximum(z + y, 0.0)


if __name__ == "__main__":
    key = jax.random.PRNGKey(0)
    N, C_in, C_out, L = 2, 4, 8, 16

    k_x, k_y, k_w, k_g, k_b, k_m, k_v = jax.random.split(key, 7)
    x = jax.random.normal(k_x, (N, C_in, L), dtype=jnp.float32)
    y = jax.random.normal(k_y, (N, C_out, L), dtype=jnp.float32)

    # Deterministic parameter init (Conv1d kernel_size=1, bias=False -> weight (C_out, C_in, 1)).
    conv_w = jax.random.normal(k_w, (C_out, C_in), dtype=jnp.float32) * (1.0 / C_in) ** 0.5
    bn_gamma = 1.0 + 0.1 * jax.random.normal(k_g, (C_out,), dtype=jnp.float32)
    bn_beta = 0.1 * jax.random.normal(k_b, (C_out,), dtype=jnp.float32)
    bn_mean = 0.1 * jax.random.normal(k_m, (C_out,), dtype=jnp.float32)
    bn_var = jnp.abs(1.0 + 0.1 * jax.random.normal(k_v, (C_out,), dtype=jnp.float32))

    out = shortcut_forward(x, y, conv_w, bn_gamma, bn_beta, bn_mean, bn_var)
    out = jax.block_until_ready(out)

    ref = reference_forward(x, y, conv_w, bn_gamma, bn_beta, bn_mean, bn_var)
    assert out.shape == (N, C_out, L)
    assert jnp.allclose(out, ref, atol=1e-5, rtol=1e-5), "mismatch vs reference"

    print("KERNEL_OK")
</pallas_src>

<mosaic_0001>
module attributes {stable_mosaic.version = 11 : i64} {
  func.func @shortcut_kernel(%arg0: i32, %arg1: i32, %arg2: memref<1x8x128xf32, #tpu.memory_space<vmem>>, %arg3: memref<8x8xf32, #tpu.memory_space<vmem>>, %arg4: memref<8x1xf32, #tpu.memory_space<vmem>>, %arg5: memref<1x8x128xf32, #tpu.memory_space<vmem>>, %arg6: memref<1x8x128xf32, #tpu.memory_space<vmem>>) attributes {dimension_semantics = [#tpu.dimension_semantics<parallel>, #tpu.dimension_semantics<parallel>], iteration_bounds = array<i64: 2, 1>, scalar_prefetch = 0 : i64, scratch_operands = 0 : i64, tpu.core_type = #tpu.core_type<tc>, window_params = [{transform_indices = @transform_0, window_bounds = array<i64: 1, 8, 128>}, {pipeline_mode = #tpu.pipeline_mode<synchronous>, transform_indices = @transform_1, window_bounds = array<i64: 8, 8>}, {pipeline_mode = #tpu.pipeline_mode<synchronous>, transform_indices = @transform_2, window_bounds = array<i64: 8, 1>}, {transform_indices = @transform_3, window_bounds = array<i64: 1, 8, 128>}, {transform_indices = @transform_4, window_bounds = array<i64: 1, 8, 128>}]} {
    %c0 = arith.constant 0 : index
    %c0_0 = arith.constant 0 : index
    %c0_1 = arith.constant 0 : index
    %0 = vector.load %arg2[%c0, %c0_0, %c0_1] : memref<1x8x128xf32, #tpu.memory_space<vmem>>, vector<1x8x128xf32>
    %1 = vector.shape_cast %0 : vector<1x8x128xf32> to vector<8x128xf32>
    %c0_2 = arith.constant 0 : index
    %c0_3 = arith.constant 0 : index
    %2 = vector.load %arg3[%c0_2, %c0_3] : memref<8x8xf32, #tpu.memory_space<vmem>>, vector<8x8xf32>
    %cst = arith.constant dense<0.000000e+00> : vector<8x128xf32>
    %3 = tpu.matmul %2, %1, %cst {dimension_numbers = #tpu.dot_dimension_numbers<[1], [0], [0], [1], [0, 0, 1, 1], [], []>} : vector<8x8xf32>, vector<8x128xf32>, vector<8x128xf32> -> vector<8x128xf32>
    %c0_4 = arith.constant 0 : index
    %c0_5 = arith.constant 0 : index
    %4 = vector.load %arg4[%c0_4, %c0_5] : memref<8x1xf32, #tpu.memory_space<vmem>>, vector<8x1xf32>
    %5 = vector.broadcast %4 : vector<8x1xf32> to vector<8x128xf32>
    %6 = arith.addf %3, %5 : vector<8x128xf32>
    %c0_6 = arith.constant 0 : index
    %c0_7 = arith.constant 0 : index
    %c0_8 = arith.constant 0 : index
    %7 = vector.load %arg5[%c0_6, %c0_7, %c0_8] : memref<1x8x128xf32, #tpu.memory_space<vmem>>, vector<1x8x128xf32>
    %8 = vector.shape_cast %7 : vector<1x8x128xf32> to vector<8x128xf32>
    %9 = arith.addf %6, %8 : vector<8x128xf32>
    %cst_9 = arith.constant 0.000000e+00 : f32
    %10 = vector.broadcast %cst_9 : f32 to vector<8x128xf32>
    %11 = arith.maximumf %9, %10 : vector<8x128xf32>
    %c0_10 = arith.constant 0 : index
    %c0_11 = arith.constant 0 : index
    %c0_12 = arith.constant 0 : index
    %12 = vector.load %arg6[%c0_10, %c0_11, %c0_12] : memref<1x8x128xf32, #tpu.memory_space<vmem>>, vector<1x8x128xf32>
    %13 = vector.shape_cast %12 : vector<1x8x128xf32> to vector<8x128xf32>
    %14 = vector.shape_cast %11 : vector<8x128xf32> to vector<1x8x128xf32>
    tpu.vector_store %arg6[%c0_10, %c0_11, %c0_12], %14 {strides = array<i32>} : memref<1x8x128xf32, #tpu.memory_space<vmem>>, vector<1x8x128xf32>,
    return
  }
  func.func @transform_0(%arg0: i32, %arg1: i32) -> (i32, i32, i32) {
    %c0_i32 = arith.constant 0 : i32
    %c0_i32_0 = arith.constant 0 : i32
    return %arg0, %c0_i32, %arg1 : i32, i32, i32
  }
  func.func @transform_1(%arg0: i32, %arg1: i32) -> (i32, i32) {
    %c0_i32 = arith.constant 0 : i32
    %c0_i32_0 = arith.constant 0 : i32
    %c0_i32_1 = arith.constant 0 : i32
    return %c0_i32, %c0_i32_0 : i32, i32
  }
  func.func @transform_2(%arg0: i32, %arg1: i32) -> (i32, i32) {
    %c0_i32 = arith.constant 0 : i32
    %c0_i32_0 = arith.constant 0 : i32
    %c0_i32_1 = arith.constant 0 : i32
    return %c0_i32, %c0_i32_0 : i32, i32
  }
  func.func @transform_3(%arg0: i32, %arg1: i32) -> (i32, i32, i32) {
    %c0_i32 = arith.constant 0 : i32
    %c0_i32_0 = arith.constant 0 : i32
    return %arg0, %c0_i32, %arg1 : i32, i32, i32
  }
  func.func @transform_4(%arg0: i32, %arg1: i32) -> (i32, i32, i32) {
    %c0_i32 = arith.constant 0 : i32
    %c0_i32_0 = arith.constant 0 : i32
    return %arg0, %c0_i32, %arg1 : i32, i32, i32
  }
}

</mosaic_0001>

<llo_original>
// kernel: shortcut_forward.1
$region0: #{shortcut_forward.1}
  #allocation0 [shape = 'u32[]', space=smem, size = 0x4, offset = 0x4, fixed_abs, tag = 'smem constant byte address 0x4 - core index']
  #allocation1 [shape = 'u32[72,128]{1,0:T(1,128)}', space=vmem, size = 0x9000, scoped, tag = 'internal scratch']
  %s0 = inlined_call_operand.vmem [shape: f32[2,8,128], index: 0, kind: input, shape index: {}]
  %s1 = inlined_call_operand.vmem [shape: f32[8,8], index: 1, kind: input, shape index: {}]
  %s2 = inlined_call_operand.vmem [shape: f32[8,1], index: 2, kind: input, shape index: {}]
  %s3 = inlined_call_operand.vmem [shape: f32[2,8,128], index: 3, kind: input, shape index: {}]
  %s4 = inlined_call_operand.hbm [shape: f32[2,8,128], index: 4, kind: output, shape index: {}]
  %s5 = sld [smem:[#allocation0]]
  $region49: #{shortcut_forward.1} parent=0
    _
  %s7 = ssub.s32 1, %s5
  %s8 = scalar_select 0, %s7, %s5
  $region1: #{shortcut_forward.1} parent=0
    #allocation2 [shape = 'u8[8192]{0}', space=vmem, size = 0x2000, scoped, tag = 'output window, operand 0']
    #allocation3 [shape = 's32[2]{0}', space=sflag, size = 0x8, scoped, tag = 'scoped memory for shortcut_forward.1']
    %9 = vsyncpa [#allocation3], 0
    %s10 = scalar_lea.sflag [#allocation3], 1
    %11 = vsyncpa %s10, 0
    loop: start=0, step=1, limit=4
    $region2: #{shortcut_forward.1} parent=1 // loop_pre_header
      _
    $region3: #{shortcut_forward.1} parent=1 // loop_header
      %s13 = sphi 0, %s17
      %p14 = scmp.ge.s32.totalorder %s13, 4
      %s20 = sphi 0, %s32
      %s21 = sphi 0, %s28
      %s22 = sphi 0, %s20
      %s23 = sphi 0, %s21
      %s24 = sphi 0, %s22
      %s25 = sphi 0, %s23
      %s37 = sphi 0, %s39
      %s40 = sphi 0, %s37
      %s41 = sphi 0, %s40
      %s57 = sphi 0, %s41
      %s61 = sphi 0, %s61
      %s63 = sphi 0, %s61
      %s64 = sphi 0, %s63
      %s78 = sphi 0, %s64
      %s82 = sphi 0, %s82
      %s84 = sphi 0, %s82
      %s85 = sphi 0, %s84
      %s99 = sphi 0, %s85
      %s107 = sphi 0, %s109
      %s110 = sphi 0, %s107
      %s111 = sphi 0, %s110
      %s127 = sphi 0, %s111
      %s135 = sphi 0, %s137
      %s138 = sphi 0, %s135
      %s139 = sphi 0, %s138
      %s155 = sphi 0, %s139
    $region4: #{shortcut_forward.1} parent=1 // loop_header_branch
      %16 = sbr.rel (%p14) target = $region8
    $region5: #{shortcut_forward.1} parent=1 // loop_body
      %s18 = ssub.s32 %s13, 1
      %s19 = ssub.s32 %s13, 2
      %s26 = sadd.s32 1, %s21
      %p27 = scmp.ge.s32.totalorder %s26, 1
      %s28 = scalar_select %p27, 0, %s26
      %s29 = sadd.s32 1, %s20
      %s30 = scalar_select %p27, %s29, %s20
      %p31 = scmp.ge.s32.totalorder %s30, 2
      %s32 = scalar_select %p31, 0, %s30
      %s33 = ssub.s32 %s20, %s32
      %s34 = ssub.s32 %s21, %s28
      %s35 = sor.u32 %s33, %s34
      %p36 = scmp.eq.s32.totalorder %s35, 0
      %s38 = sadd.s32 %s37, 1
      %s39 = scalar_select %p36, %s37, %s38
      %p42 = pneg %p36
      %p43 = scmp.eq.s32.totalorder %s13, 1
      %p44 = por %p42, %p43
      %p45 = scmp.ne.s32.totalorder %s37, %s40
      %p46 = scmp.eq.s32.totalorder %s13, 0
      %p47 = por %p45, %p46
      %p48 = scmp.ne.s32.totalorder %s37, %s40
      %p49 = scmp.eq.s32.totalorder %s18, 1
      %p50 = por %p48, %p49
      %p51 = scmp.ne.s32.totalorder %s40, %s41
      %p52 = scmp.eq.s32.totalorder %s18, 0
      %p53 = por %p51, %p52
      %p54 = scmp.ne.s32.totalorder %s40, %s41
      %p55 = scmp.eq.s32.totalorder %s19, 1
      %p56 = por %p54, %p55
      %p58 = scmp.ne.s32.totalorder %s41, %s57
      %p59 = scmp.eq.s32.totalorder %s19, 0
      %p60 = por %p58, %p59
      %s62 = sadd.s32 %s61, 1
      %p65 = scmp.eq.s32.totalorder %s13, 1
      %p66 = scmp.ne.s32.totalorder %s61, %s63
      %p67 = scmp.eq.s32.totalorder %s13, 0
      %p68 = por %p66, %p67
      %p69 = scmp.ne.s32.totalorder %s61, %s63
      %p70 = scmp.eq.s32.totalorder %s18, 1
      %p71 = por %p69, %p70
      %p72 = scmp.ne.s32.totalorder %s63, %s64
      %p73 = scmp.eq.s32.totalorder %s18, 0
      %p74 = por %p72, %p73
      %p75 = scmp.ne.s32.totalorder %s63, %s64
      %p76 = scmp.eq.s32.totalorder %s19, 1
      %p77 = por %p75, %p76
      %p79 = scmp.ne.s32.totalorder %s64, %s78
      %p80 = scmp.eq.s32.totalorder %s19, 0
      %p81 = por %p79, %p80
      %s83 = sadd.s32 %s82, 1
      %p86 = scmp.eq.s32.totalorder %s13, 1
      %p87 = scmp.ne.s32.totalorder %s82, %s84
      %p88 = scmp.eq.s32.totalorder %s13, 0
      %p89 = por %p87, %p88
      %p90 = scmp.ne.s32.totalorder %s82, %s84
      %p91 = scmp.eq.s32.totalorder %s18, 1
      %p92 = por %p90, %p91
      %p93 = scmp.ne.s32.totalorder %s84, %s85
      %p94 = scmp.eq.s32.totalorder %s18, 0
      %p95 = por %p93, %p94
      %p96 = scmp.ne.s32.totalorder %s84, %s85
      %p97 = scmp.eq.s32.totalorder %s19, 1
      %p98 = por %p96, %p97
      %p100 = scmp.ne.s32.totalorder %s85, %s99
      %p101 = scmp.eq.s32.totalorder %s19, 0
      %p102 = por %p100, %p101
      %s103 = ssub.s32 %s20, %s32
      %s104 = ssub.s32 %s21, %s28
      %s105 = sor.u32 %s103, %s104
      %p106 = scmp.eq.s32.totalorder %s105, 0
      %s108 = sadd.s32 %s107, 1
      %s109 = scalar_select %p106, %s107, %s108
      %p112 = pneg %p106
      %p113 = scmp.eq.s32.totalorder %s13, 1
      %p114 = por %p112, %p113
      %p115 = scmp.ne.s32.totalorder %s107, %s110
      %p116 = scmp.eq.s32.totalorder %s13, 0
      %p117 = por %p115, %p116
      %p118 = scmp.ne.s32.totalorder %s107, %s110
      %p119 = scmp.eq.s32.totalorder %s18, 1
      %p120 = por %p118, %p119
      %p121 = scmp.ne.s32.totalorder %s110, %s111
      %p122 = scmp.eq.s32.totalorder %s18, 0
      %p123 = por %p121, %p122
      %p124 = scmp.ne.s32.totalorder %s110, %s111
      %p125 = scmp.eq.s32.totalorder %s19, 1
      %p126 = por %p124, %p125
      %p128 = scmp.ne.s32.totalorder %s111, %s127
      %p129 = scmp.eq.s32.totalorder %s19, 0
      %p130 = por %p128, %p129
      %s131 = ssub.s32 %s20, %s32
      %s132 = ssub.s32 %s21, %s28
      %s133 = sor.u32 %s131, %s132
      %p134 = scmp.eq.s32.totalorder %s133, 0
      %s136 = sadd.s32 %s135, 1
      %s137 = scalar_select %p134, %s135, %s136
      %p140 = pneg %p134
      %p141 = scmp.eq.s32.totalorder %s13, 1
      %p142 = por %p140, %p141
      %p143 = scmp.ne.s32.totalorder %s135, %s138
      %p144 = scmp.eq.s32.totalorder %s13, 0
      %p145 = por %p143, %p144
      %p146 = scmp.ne.s32.totalorder %s135, %s138
      %p147 = scmp.eq.s32.totalorder %s18, 1
      %p148 = por %p146, %p147
      %p149 = scmp.ne.s32.totalorder %s138, %s139
      %p150 = scmp.eq.s32.totalorder %s18, 0
      %p151 = por %p149, %p150
      %p152 = scmp.ne.s32.totalorder %s138, %s139
      %p153 = scmp.eq.s32.totalorder %s19, 1
      %p154 = por %p152, %p153
      %p156 = scmp.ne.s32.totalorder %s139, %s155
      %p157 = scmp.eq.s32.totalorder %s19, 0
      %p158 = por %p156, %p157
      %p159 = scmp.le.s32.totalorder 1, %s13
      %p160 = scmp.lt.s32.totalorder %s13, 3
      %p161 = pnand %p159, %p160
      %p162 = pneg %p161
      // Predicated region
      $region9: #{shortcut_forward.1} parent=5 // pred_check
        _
      $region10: #{shortcut_forward.1} parent=5 // pred_check_branch
        %164 = sbr.rel (%p161) target = $region12
      $region11: #{shortcut_forward.1} parent=5 // pred_region
        %s165 = ssub.s32 %s13, 1
        // Predicated region
        $region13: #{shortcut_forward.1} parent=11 // pred_check
          %p166 = pneg %p74
        $region14: #{shortcut_forward.1} parent=11 // pred_check_branch
          %168 = sbr.rel (%p166) target = $region16
        $region15: #{shortcut_forward.1} parent=11 // pred_region
          _
        $region16: #{shortcut_forward.1} parent=11 // pred_fallthru
          _
        // Predicated region
        $region17: #{shortcut_forward.1} parent=11 // pred_check
          %p169 = pneg %p95
        $region18: #{shortcut_forward.1} parent=11 // pred_check_branch
          %171 = sbr.rel (%p169) target = $region20
        $region19: #{shortcut_forward.1} parent=11 // pred_region
          _
        $region20: #{shortcut_forward.1} parent=11 // pred_fallthru
          _
      $region12: #{shortcut_forward.1} parent=5 // pred_fallthru
        _
      %p172 = scmp.lt.s32.totalorder %s13, 2
      // Predicated region
      $region21: #{shortcut_forward.1} parent=5 // pred_check
        %p173 = pneg %p172
      $region22: #{shortcut_forward.1} parent=5 // pred_check_branch
        %175 = sbr.rel (%p173) target = $region24
      $region23: #{shortcut_forward.1} parent=5 // pred_region
        // Predicated region
        $region25: #{shortcut_forward.1} parent=23 // pred_check
          %p176 = pneg %p47
        $region26: #{shortcut_forward.1} parent=23 // pred_check_branch
          %178 = sbr.rel (%p176) target = $region28
        $region27: #{shortcut_forward.1} parent=23 // pred_region
          %p179 = scmp.lt.s32.totalorder %s20, 1
          %s180 = scalar_select %p179, %s20, 1
          %p181 = scmp.lt.s32.totalorder %s21, 0
          %s182 = scalar_select %p181, %s21, 0
          %s183 = sadd.s32 %s182, %s180
          %s184 = smul.addr %s183, 8
          %s185 = scalar_lea.vmem %s0, %s184
        $region28: #{shortcut_forward.1} parent=23 // pred_fallthru
          _
        // Predicated region
        $region29: #{shortcut_forward.1} parent=23 // pred_check
          %p186 = pneg %p117
        $region30: #{shortcut_forward.1} parent=23 // pred_check_branch
          %188 = sbr.rel (%p186) target = $region32
        $region31: #{shortcut_forward.1} parent=23 // pred_region
          %p189 = scmp.lt.s32.totalorder %s20, 1
          %s190 = scalar_select %p189, %s20, 1
          %p191 = scmp.lt.s32.totalorder %s21, 0
          %s192 = scalar_select %p191, %s21, 0
          %s193 = sadd.s32 %s192, %s190
          %s194 = smul.addr %s193, 8
          %s195 = scalar_lea.vmem %s3, %s194
        $region32: #{shortcut_forward.1} parent=23 // pred_fallthru
          _
      $region24: #{shortcut_forward.1} parent=5 // pred_fallthru
        _
      %p196 = scmp.le.s32.totalorder 1, %s13
      %p197 = scmp.lt.s32.totalorder %s13, 3
      %p198 = pnand %p196, %p197
      %p199 = pneg %p198
      // Predicated region
      $region33: #{shortcut_forward.1} parent=5 // pred_check
        _
      $region34: #{shortcut_forward.1} parent=5 // pred_check_branch
        %201 = sbr.rel (%p198) target = $region36
      $region35: #{shortcut_forward.1} parent=5 // pred_region
        %s202 = ssub.s32 %s13, 1
        %p203 = scmp.lt.s32.totalorder %s22, 1
        %s204 = scalar_select %p203, %s22, 1
        %p205 = scmp.lt.s32.totalorder %s23, 0
        %s206 = scalar_select %p205, %s23, 0
        %s207 = sadd.s32 %s206, %s204
        %s208 = smul.addr %s207, 8
        %s209 = scalar_lea.vmem %s0, %s208
        %p210 = pneg %p53
        %p211 = pneg %p50
        %p212 = pneg %p74
        %p213 = pneg %p71
        %p214 = pneg %p95
        %p215 = pneg %p92
        %p216 = scmp.lt.s32.totalorder %s22, 1
        %s217 = scalar_select %p216, %s22, 1
        %p218 = scmp.lt.s32.totalorder %s23, 0
        %s219 = scalar_select %p218, %s23, 0
        %s220 = sadd.s32 %s219, %s217
        %s221 = smul.addr %s220, 8
        %s222 = scalar_lea.vmem %s3, %s221
        %p223 = pneg %p123
        %p224 = pneg %p120
        %p225 = pneg %p151
        %p226 = pneg %p148
        %s227 = sand.u32 %s138, 1
        %s228 = scalar_lea.sflag [#allocation3], %s227
        %s229 = sand.u32 %s138, 1
        %s230 = smul.addr %s229, 8
        %s231 = scalar_lea.vmem [#allocation2], %s230
        %p232 = scmp.lt.s32.totalorder %s22, 1
        %s233 = scalar_select %p232, %s22, 1
        %p234 = scmp.lt.s32.totalorder %s23, 0
        %s235 = scalar_select %p234, %s23, 0
        %s236 = sadd.s32 %s235, %s233
        %s237 = smul.addr %s236, 8
        %s238 = scalar_lea.vmem %s0, %s237
        %p239 = scmp.lt.s32.totalorder %s22, 1
        %s240 = scalar_select %p239, %s22, 1
        %p241 = scmp.lt.s32.totalorder %s23, 0
        %s242 = scalar_select %p241, %s23, 0
        %s243 = sadd.s32 %s242, %s240
        %s244 = smul.addr %s243, 8
        %s245 = scalar_lea.vmem %s3, %s244
        %v246 = vld [vmem:[%s238] sm:$0xff]
        %v247 = vld [vmem:[%s1] sm:$0xff]
        %v248 = vld [vmem:[%s2] sm:$0xff]
        %250 = vset.pattern.permute.xlu0 0
        %251 = vperm.xlu0 %250, %v248
        %v252 = vpop.permute.xlu0 %251
        %vm254 = vcmask 64512
        %v256 = vsel %vm254, %v247, 0
        %258 = vmatpush.msra.mxu0 0.0
        %259 = vmatpush.msra.mxu0 0.0
        %260 = vmatpush.msra.mxu0 0.0
        %261 = vmatpush.msra.mxu0 0.0
        %262 = vmatpush.msra.mxu0 0.0
        %263 = vmatpush.msra.mxu0 0.0
        %264 = vmatpush.msra.mxu0 0.0
        %265 = vmatpush.msra.mxu0 0.0
        %266 = vmatpush.msra.mxu0 0.0
        %267 = vmatpush.msra.mxu0 0.0
        %268 = vmatpush.msra.mxu0 0.0
        %269 = vmatpush.msra.mxu0 0.0
        %270 = vmatpush.msra.mxu0 0.0
        %271 = vmatpush.msra.mxu0 0.0
        %272 = vmatpush.msra.mxu0 0.0
        %273 = vmatpush.msra.mxu0 %v246
        %274 = vmatmul.f32.gmra.mxu0 %v256
        %v275 = vpop.f32.mrf.mxu0
        %v276 = vadd.f32 %v252, %v275
        %277 = vdwg.mxu0
        %v278 = vld [vmem:[%s245] sm:$0xff]
        %v279 = vadd.f32 %v276, %v278
        %v280 = vmax.f32 %v279, 0.0
        %281 = vst [vmem:[%s231] sm:$0xff] %v280
        %s282 = sand.u32 %s138, 1
        %s283 = scalar_lea.sflag [#allocation3], %s282
        %s284 = sand.u32 %s138, 1
        %s285 = smul.addr %s284, 8
        %s286 = scalar_lea.vmem [#allocation2], %s285
        // Predicated region
        $region37: #{shortcut_forward.1} parent=35 // pred_check
          %p287 = pneg %p148
        $region38: #{shortcut_forward.1} parent=35 // pred_check_branch
          %289 = sbr.rel (%p287) target = $region40
        $region39: #{shortcut_forward.1} parent=35 // pred_region
          %291 = vsyncadd %s283, 0
          %s292 = sadd.s32 %s23, %s22
          %s293 = smul.addr %s292, 8
          %s294 = scalar_lea.hbm %s4, %s293
          %s296 = sshll.u32 %s286, 4
          %s297 = int_to_ptr.vmem [resolvable:$true] %s296
          %s298 = sshll.u32 %s294, 4
          %s299 = int_to_ptr.hbm [resolvable:$true] %s298
          %301 = dma.vmem_to_hbm [thread:$0]  %s297, 128, %s299, %s283
        $region40: #{shortcut_forward.1} parent=35 // pred_fallthru
          _
      $region36: #{shortcut_forward.1} parent=5 // pred_fallthru
        _
      %p302 = scmp.le.s32.totalorder 2, %s13
      // Predicated region
      $region41: #{shortcut_forward.1} parent=5 // pred_check
        %p303 = pneg %p302
      $region42: #{shortcut_forward.1} parent=5 // pred_check_branch
        %305 = sbr.rel (%p303) target = $region44
      $region43: #{shortcut_forward.1} parent=5 // pred_region
        %s306 = ssub.s32 %s13, 2
        // Predicated region
        $region45: #{shortcut_forward.1} parent=43 // pred_check
          %p307 = pneg %p154
        $region46: #{shortcut_forward.1} parent=43 // pred_check_branch
          %309 = sbr.rel (%p307) target = $region48
        $region47: #{shortcut_forward.1} parent=43 // pred_region
          %s310 = sand.u32 %s139, 1
          %s311 = scalar_lea.sflag [#allocation3], %s310
          %s312 = sand.u32 %s139, 1
          %s313 = smul.addr %s312, 8
          %s314 = scalar_lea.vmem [#allocation2], %s313
          %316 = dma.done %s311, 128
        $region48: #{shortcut_forward.1} parent=43 // pred_fallthru
          _
      $region44: #{shortcut_forward.1} parent=5 // pred_fallthru
        _
    $region6: #{shortcut_forward.1} parent=1 // loop_footer
      %s17 = sadd.s32 1, %s13
    $region7: #{shortcut_forward.1} parent=1 // loop_footer_branch
      %12 = sbr.rel target = $region3
    $region8: #{shortcut_forward.1} parent=1 // loop_exit
      _
    %317 = vsyncpa [#allocation3], 1
    %s318 = scalar_lea.sflag [#allocation3], 1
    %319 = vsyncpa %s318, 1

</llo_original>
